<compile_context>
chip_gen: v5e
topology: v5e:2x2
jax: 0.10.0
libtpu: 0.0.40
codegen_flags: <defaults>
</compile_context>

<pallas_src>
import functools

import jax
import jax.numpy as jnp
from jax.experimental import pallas as pl
from jax.experimental.pallas import tpu as pltpu

HIDDEN = 16   # ModifiedGCN(feature_num, 16) -> ModifiedGCN(16, output_num)
LANE = 128    # TPU lane width — pad feature dims to this for unmasked stores


def _round_up(x, m):
    return (x + m - 1) // m * m


# ---------------------------------------------------------------------------
# Fused small-graph kernel: everything resident in VMEM, no grid at all.
# ---------------------------------------------------------------------------
def _gcn2_fused_kernel(a_ref, x_ref, w1_ref, w2_ref, bias_ref, o_ref):
    hp = w1_ref.shape[1]            # padded hidden width
    op = w2_ref.shape[1]            # padded output width
    bias = bias_ref[...]            # (2, max(hp, op)) packed biases
    b1 = bias[0:1, :hp]
    b2 = bias[1:2, :op]
    # Layer 1: relu(A @ (X W1) + b1)   (project-then-aggregate is FLOP-optimal)
    xw1 = jnp.dot(x_ref[...], w1_ref[...], preferred_element_type=jnp.float32)
    h1 = jnp.dot(a_ref[...], xw1, preferred_element_type=jnp.float32) + b1
    h1 = jnp.maximum(h1, 0.0)
    # Layer 2: A @ (H1 W2) + b2
    hw2 = jnp.dot(h1, w2_ref[...], preferred_element_type=jnp.float32)
    o_ref[...] = (
        jnp.dot(a_ref[...], hw2, preferred_element_type=jnp.float32) + b2
    ).astype(o_ref.dtype)


def _gcn_fused(a_hat, x, w1p, w2p, bias_packed):
    n = x.shape[0]
    op = w2p.shape[1]
    vmem = pl.BlockSpec(memory_space=pltpu.MemorySpace.VMEM)
    return pl.pallas_call(
        _gcn2_fused_kernel,
        out_shape=jax.ShapeDtypeStruct((n, op), jnp.float32),
        in_specs=[vmem, vmem, vmem, vmem, vmem],
        out_specs=vmem,
    )(a_hat, x, w1p, w2p, bias_packed)


# ---------------------------------------------------------------------------
# Row-tiled path for graphs whose dense A_hat does not fit in VMEM.
# ---------------------------------------------------------------------------
def _project_kernel(x_ref, w_ref, o_ref):
    # Z[rows] = X[rows] @ W
    o_ref[...] = jnp.dot(
        x_ref[...], w_ref[...], preferred_element_type=jnp.float32
    ).astype(o_ref.dtype)


def _aggregate_kernel(a_ref, z_ref, b_ref, o_ref, *, apply_relu):
    # out[rows] = (relu)(A[rows, :] @ Z + b)
    y = jnp.dot(a_ref[...], z_ref[...], preferred_element_type=jnp.float32)
    y = y + b_ref[...]
    if apply_relu:
        y = jnp.maximum(y, 0.0)
    o_ref[...] = y.astype(o_ref.dtype)


def _project(x, w, tm):
    n, f = x.shape
    hp = w.shape[1]
    return pl.pallas_call(
        _project_kernel,
        out_shape=jax.ShapeDtypeStruct((n, hp), jnp.float32),
        grid=(n // tm,),
        in_specs=[
            pl.BlockSpec((tm, f), lambda i: (i, 0)),   # row slice of features
            pl.BlockSpec((f, hp), lambda i: (0, 0)),   # resident weight
        ],
        out_specs=pl.BlockSpec((tm, hp), lambda i: (i, 0)),
        compiler_params=pltpu.CompilerParams(dimension_semantics=("parallel",)),
    )(x, w)


def _aggregate(a, z, b, tm, apply_relu):
    n = a.shape[0]
    hp = z.shape[1]
    # NOTE(scale): for very large N also raise vmem_limit_bytes (v5e default scoped
    # VMEM is only 16 MiB) and store A_hat / Z in bf16 on v6e/v7x — the aggregation
    # is HBM-bandwidth-bound on the (TM, N) A slice.
    return pl.pallas_call(
        functools.partial(_aggregate_kernel, apply_relu=apply_relu),
        out_shape=jax.ShapeDtypeStruct((n, hp), jnp.float32),
        grid=(n // tm,),
        in_specs=[
            pl.BlockSpec((tm, n), lambda i: (i, 0)),   # (TM, N) slice of A_hat
            pl.BlockSpec((n, hp), lambda i: (0, 0)),   # resident projected features
            pl.BlockSpec((1, hp), lambda i: (0, 0)),   # bias (fetched once)
        ],
        out_specs=pl.BlockSpec((tm, hp), lambda i: (i, 0)),
        compiler_params=pltpu.CompilerParams(dimension_semantics=("parallel",)),
    )(a, z, b)


# ---------------------------------------------------------------------------
# Wrapper
# ---------------------------------------------------------------------------
def gcn_forward(a_hat, x, w1, b1, w2, b2, *, row_block=None):
    """2-layer GCN forward.

    row_block=None -> single fused, fully-resident kernel (small graphs).
    row_block=TM   -> row-tiled path (TM multiple of 8, ideally 128-512) for
                      graphs whose dense A_hat cannot live wholly in VMEM.
    """
    n, f = x.shape
    hidden = w1.shape[1]
    out_dim = w2.shape[1]
    hp = _round_up(hidden, LANE)
    op = _round_up(out_dim, LANE)

    # Zero-pad parameter feature dims to the 128-lane boundary. Padded
    # columns/rows are zero so the math is exact; padded output lanes are
    # sliced off below. This makes every kernel store lane-dense.
    w1p = jnp.zeros((f, hp), jnp.float32).at[:, :hidden].set(w1)
    w2p = jnp.zeros((hp, op), jnp.float32).at[:hidden, :out_dim].set(w2)
    b1p = jnp.zeros((1, hp), jnp.float32).at[:, :hidden].set(b1.reshape(1, hidden))
    b2p = jnp.zeros((1, op), jnp.float32).at[:, :out_dim].set(b2.reshape(1, out_dim))

    if row_block is None:
        # Pack both biases into a single tiny array -> one fewer DMA descriptor
        # in an otherwise launch-latency-bound kernel.
        bp = max(hp, op)
        bias_packed = jnp.zeros((2, bp), jnp.float32)
        bias_packed = bias_packed.at[0, :hp].set(b1p[0])
        bias_packed = bias_packed.at[1, :op].set(b2p[0])
        out = _gcn_fused(a_hat, x, w1p, w2p, bias_packed)
        return out[:, :out_dim]

    tm = int(row_block)
    assert tm % 8 == 0, "row_block must be a multiple of 8 (sublane width)"
    n_pad = _round_up(n, tm)
    if n_pad != n:
        # Zero rows/cols contribute nothing; padded output rows are sliced off.
        a_p = jnp.zeros((n_pad, n_pad), jnp.float32).at[:n, :n].set(a_hat)
        x_p = jnp.zeros((n_pad, f), jnp.float32).at[:n, :].set(x)
    else:
        a_p, x_p = a_hat, x

    z1 = _project(x_p, w1p, tm)                           # X @ W1
    h1 = _aggregate(a_p, z1, b1p, tm, apply_relu=True)    # relu(A @ Z1 + b1)
    z2 = _project(h1, w2p, tm)                            # H1 @ W2
    out = _aggregate(a_p, z2, b2p, tm, apply_relu=False)  # A @ Z2 + b2
    return out[:n, :out_dim]


# ---------------------------------------------------------------------------
# Plain-JAX glue: GCN-normalized dense adjacency and Glorot init.
# ---------------------------------------------------------------------------
def build_normalized_adjacency(edge_index, num_nodes):
    """GCN normalization: A_hat = D^{-1/2} (A + I) D^{-1/2}, dense."""
    src, dst = edge_index
    a = jnp.zeros((num_nodes, num_nodes), jnp.float32)
    a = a.at[src, dst].set(1.0)
    a = a.at[dst, src].set(1.0)                      # undirected
    a = a + jnp.eye(num_nodes, dtype=jnp.float32)    # self loops
    deg = jnp.sum(a, axis=1)
    d_inv_sqrt = jnp.where(deg > 0, 1.0 / jnp.sqrt(deg), 0.0)
    return a * d_inv_sqrt[:, None] * d_inv_sqrt[None, :]


def glorot(key, shape):
    fan_in, fan_out = shape
    limit = jnp.sqrt(6.0 / (fan_in + fan_out))
    return jax.random.uniform(key, shape, jnp.float32, -limit, limit)


def _reference(a_hat, x, w1, b1, w2, b2):
    hi = jax.lax.Precision.HIGHEST
    h1 = jax.nn.relu(jnp.dot(a_hat, jnp.dot(x, w1, precision=hi), precision=hi) + b1)
    return jnp.dot(a_hat, jnp.dot(h1, w2, precision=hi), precision=hi) + b2


def _make_graph(key, num_nodes, n_extra):
    ring_src = jnp.arange(num_nodes)
    ring_dst = (ring_src + 1) % num_nodes
    extra_src = jax.random.randint(key, (n_extra,), 0, num_nodes)
    extra_dst = (extra_src + 5) % num_nodes
    return jnp.stack(
        [jnp.concatenate([ring_src, extra_src]),
         jnp.concatenate([ring_dst, extra_dst])], axis=0)


if __name__ == "__main__":
    key = jax.random.PRNGKey(0)

    # TODO(synk): ModifiedGCN drop_method=2 (message/edge dropout during training)
    # is stochastic; forward here is the deterministic eval-mode pass (dropout = id).

    # ---- Test A: module-sized toy graph, fused fully-resident path -------------
    num_nodes, feature_num, output_num = 16, 32, 8
    k_x, k_e, k_w1, k_w2, key = jax.random.split(key, 5)
    x = jax.random.normal(k_x, (num_nodes, feature_num), jnp.float32)
    edge_index = _make_graph(k_e, num_nodes, 8)
    a_hat = build_normalized_adjacency(edge_index, num_nodes)
    w1 = glorot(k_w1, (feature_num, HIDDEN))
    b1 = jnp.zeros((1, HIDDEN), jnp.float32)
    w2 = glorot(k_w2, (HIDDEN, output_num))
    b2 = jnp.zeros((1, output_num), jnp.float32)

    out = jax.block_until_ready(gcn_forward(a_hat, x, w1, b1, w2, b2))
    ref = _reference(a_hat, x, w1, b1, w2, b2)
    assert out.shape == (num_nodes, output_num)
    assert jnp.allclose(out, ref, atol=1e-4, rtol=1e-4)

    # ---- Test B: larger graph, row-tiled path (exercises grid + padding) -------
    num_nodes2, feature_num2, output_num2 = 200, 64, 8
    k_x2, k_e2, k_w1b, k_w2b, key = jax.random.split(key, 5)
    x2 = jax.random.normal(k_x2, (num_nodes2, feature_num2), jnp.float32)
    edge_index2 = _make_graph(k_e2, num_nodes2, 64)
    a_hat2 = build_normalized_adjacency(edge_index2, num_nodes2)
    w1b = glorot(k_w1b, (feature_num2, HIDDEN))
    b1b = jnp.zeros((1, HIDDEN), jnp.float32)
    w2b = glorot(k_w2b, (HIDDEN, output_num2))
    b2b = jnp.zeros((1, output_num2), jnp.float32)

    out2 = jax.block_until_ready(
        gcn_forward(a_hat2, x2, w1b, b1b, w2b, b2b, row_block=128))
    ref2 = _reference(a_hat2, x2, w1b, b1b, w2b, b2b)
    assert out2.shape == (num_nodes2, output_num2)
    assert jnp.allclose(out2, ref2, atol=5e-4, rtol=5e-4)

    print("KERNEL_OK")
</pallas_src>

<mosaic_0001>
module attributes {stable_mosaic.version = 11 : i64} {
  func.func @_gcn2_fused_kernel(%arg0: memref<16x16xf32, #tpu.memory_space<vmem>>, %arg1: memref<16x32xf32, #tpu.memory_space<vmem>>, %arg2: memref<32x128xf32, #tpu.memory_space<vmem>>, %arg3: memref<128x128xf32, #tpu.memory_space<vmem>>, %arg4: memref<2x128xf32, #tpu.memory_space<vmem>>, %arg5: memref<16x128xf32, #tpu.memory_space<vmem>>) attributes {dimension_semantics = [], scalar_prefetch = 0 : i64, scratch_operands = 0 : i64, tpu.core_type = #tpu.core_type<tc>} {
    %c0 = arith.constant 0 : index
    %c0_0 = arith.constant 0 : index
    %0 = vector.load %arg4[%c0, %c0_0] : memref<2x128xf32, #tpu.memory_space<vmem>>, vector<2x128xf32>
    %1 = vector.extract_strided_slice %0 {offsets = [0, 0], sizes = [1, 128], strides = [1, 1]} : vector<2x128xf32> to vector<1x128xf32>
    %2 = vector.extract_strided_slice %0 {offsets = [1, 0], sizes = [1, 128], strides = [1, 1]} : vector<2x128xf32> to vector<1x128xf32>
    %c0_1 = arith.constant 0 : index
    %c0_2 = arith.constant 0 : index
    %3 = vector.load %arg1[%c0_1, %c0_2] : memref<16x32xf32, #tpu.memory_space<vmem>>, vector<16x32xf32>
    %c0_3 = arith.constant 0 : index
    %c0_4 = arith.constant 0 : index
    %4 = vector.load %arg2[%c0_3, %c0_4] : memref<32x128xf32, #tpu.memory_space<vmem>>, vector<32x128xf32>
    %cst = arith.constant dense<0.000000e+00> : vector<16x128xf32>
    %5 = tpu.matmul %3, %4, %cst {dimension_numbers = #tpu.dot_dimension_numbers<[1], [0], [0], [1], [0, 0, 1, 1], [], []>} : vector<16x32xf32>, vector<32x128xf32>, vector<16x128xf32> -> vector<16x128xf32>
    %c0_5 = arith.constant 0 : index
    %c0_6 = arith.constant 0 : index
    %6 = vector.load %arg0[%c0_5, %c0_6] : memref<16x16xf32, #tpu.memory_space<vmem>>, vector<16x16xf32>
    %cst_7 = arith.constant dense<0.000000e+00> : vector<16x128xf32>
    %7 = tpu.matmul %6, %5, %cst_7 {dimension_numbers = #tpu.dot_dimension_numbers<[1], [0], [0], [1], [0, 0, 1, 1], [], []>} : vector<16x16xf32>, vector<16x128xf32>, vector<16x128xf32> -> vector<16x128xf32>
    %8 = vector.broadcast %1 : vector<1x128xf32> to vector<16x128xf32>
    %9 = arith.addf %7, %8 : vector<16x128xf32>
    %cst_8 = arith.constant 0.000000e+00 : f32
    %10 = vector.broadcast %cst_8 : f32 to vector<16x128xf32>
    %11 = arith.maximumf %9, %10 : vector<16x128xf32>
    %c0_9 = arith.constant 0 : index
    %c0_10 = arith.constant 0 : index
    %12 = vector.load %arg3[%c0_9, %c0_10] : memref<128x128xf32, #tpu.memory_space<vmem>>, vector<128x128xf32>
    %cst_11 = arith.constant dense<0.000000e+00> : vector<16x128xf32>
    %13 = tpu.matmul %11, %12, %cst_11 {dimension_numbers = #tpu.dot_dimension_numbers<[1], [0], [0], [1], [0, 0, 1, 1], [], []>} : vector<16x128xf32>, vector<128x128xf32>, vector<16x128xf32> -> vector<16x128xf32>
    %c0_12 = arith.constant 0 : index
    %c0_13 = arith.constant 0 : index
    %14 = vector.load %arg0[%c0_12, %c0_13] : memref<16x16xf32, #tpu.memory_space<vmem>>, vector<16x16xf32>
    %cst_14 = arith.constant dense<0.000000e+00> : vector<16x128xf32>
    %15 = tpu.matmul %14, %13, %cst_14 {dimension_numbers = #tpu.dot_dimension_numbers<[1], [0], [0], [1], [0, 0, 1, 1], [], []>} : vector<16x16xf32>, vector<16x128xf32>, vector<16x128xf32> -> vector<16x128xf32>
    %16 = vector.broadcast %2 : vector<1x128xf32> to vector<16x128xf32>
    %17 = arith.addf %15, %16 : vector<16x128xf32>
    %c0_15 = arith.constant 0 : index
    %c0_16 = arith.constant 0 : index
    %18 = vector.load %arg5[%c0_15, %c0_16] : memref<16x128xf32, #tpu.memory_space<vmem>>, vector<16x128xf32>
    tpu.vector_store %arg5[%c0_15, %c0_16], %17 {strides = array<i32>} : memref<16x128xf32, #tpu.memory_space<vmem>>, vector<16x128xf32>,
    return
  }
}

</mosaic_0001>

<llo_original>
// kernel: tpu_custom_call.1
$region0: #{tpu_custom_call.1}
  #allocation0 [shape = 'u32[]', space=smem, size = 0x4, offset = 0x4, fixed_abs, tag = 'smem constant byte address 0x4 - core index']
  #allocation1 [shape = 'u32[72,128]{1,0:T(1,128)}', space=vmem, size = 0x9000, scoped, tag = 'internal scratch']
  %s0 = inlined_call_operand.hbm [shape: f32[16,16], index: 0, kind: input, shape index: {}]
  %s1 = inlined_call_operand.hbm [shape: f32[16,32], index: 1, kind: input, shape index: {}]
  %s2 = inlined_call_operand.hbm [shape: f32[32,128], index: 2, kind: input, shape index: {}]
  %s3 = inlined_call_operand.hbm [shape: f32[128,128], index: 3, kind: input, shape index: {}]
  %s4 = inlined_call_operand.vmem [shape: f32[2,128], index: 4, kind: input, shape index: {}]
  %s5 = inlined_call_operand.hbm [shape: f32[16,128], index: 5, kind: output, shape index: {}]
  %s6 = sld [smem:[#allocation0]]
  $region46: #{tpu_custom_call.1} parent=0
    _
  %s8 = ssub.s32 1, %s6
  %s9 = scalar_select 0, %s8, %s6
  $region1: #{tpu_custom_call.1} parent=0
    #allocation2 [shape = 'u8[8192]{0}', space=vmem, size = 0x2000, scoped, tag = 'input window, operand 0, single buffered']
    #allocation3 [shape = 's32[1]{0}', space=sflag, size = 0x4, scoped, tag = 'scoped memory for tpu_custom_call.1']
    #allocation4 [shape = 's32[1]{0}', space=sflag, size = 0x4, scoped, tag = 'scoped memory for tpu_custom_call.1']
    #allocation5 [shape = 'u8[8192]{0}', space=vmem, size = 0x2000, scoped, tag = 'input window, operand 1, single buffered']
    #allocation6 [shape = 's32[1]{0}', space=sflag, size = 0x4, scoped, tag = 'scoped memory for tpu_custom_call.1']
    #allocation7 [shape = 'u8[16384]{0}', space=vmem, size = 0x4000, scoped, tag = 'input window, operand 2, single buffered']
    #allocation8 [shape = 'u8[65536]{0}', space=vmem, size = 0x10000, scoped, tag = 'input window, operand 3, single buffered']
    #allocation9 [shape = 's32[1]{0}', space=sflag, size = 0x4, scoped, tag = 'scoped memory for tpu_custom_call.1']
    #allocation10 [shape = 'u8[8192]{0}', space=vmem, size = 0x2000, scoped, tag = 'output window, operand 0, single buffered']
    %10 = vsyncpa [#allocation3], 0
    %11 = vsyncpa [#allocation6], 0
    %12 = vsyncpa [#allocation9], 0
    %13 = vsyncpa [#allocation4], 0
    // Predicated region
    $region2: #{tpu_custom_call.1} parent=1 // pred_check
      _
    $region3: #{tpu_custom_call.1} parent=1 // pred_check_branch
      %15 = sbr.rel (0) target = $region5
    $region4: #{tpu_custom_call.1} parent=1 // pred_region
      %17 = vsyncadd [#allocation3], 0
      %s18 = sshll.u32 %s0, 4
      %s19 = int_to_ptr.hbm [resolvable:$true] %s18
      %s20 = sshll.u32 [#allocation2], 4
      %s21 = int_to_ptr.vmem [resolvable:$true] %s20
      %26 = dma.hbm_to_vmem [thread:$0]  %s19, 256, %s21, [#allocation3], 128, 128, 8
    $region5: #{tpu_custom_call.1} parent=1 // pred_fallthru
      _
    // Predicated region
    $region6: #{tpu_custom_call.1} parent=1 // pred_check
      _
    $region7: #{tpu_custom_call.1} parent=1 // pred_check_branch
      %28 = sbr.rel (0) target = $region9
    $region8: #{tpu_custom_call.1} parent=1 // pred_region
      %30 = vsyncadd [#allocation6], 0
      %s31 = sshll.u32 %s1, 4
      %s32 = int_to_ptr.hbm [resolvable:$true] %s31
      %s33 = sshll.u32 [#allocation5], 4
      %s34 = int_to_ptr.vmem [resolvable:$true] %s33
      %39 = dma.hbm_to_vmem [thread:$0]  %s32, 256, %s34, [#allocation6], 128, 128, 8
    $region9: #{tpu_custom_call.1} parent=1 // pred_fallthru
      _
    // Predicated region
    $region10: #{tpu_custom_call.1} parent=1 // pred_check
      _
    $region11: #{tpu_custom_call.1} parent=1 // pred_check_branch
      %41 = sbr.rel (0) target = $region13
    $region12: #{tpu_custom_call.1} parent=1 // pred_region
      %43 = vsyncadd [#allocation6], 0
      %s44 = sshll.u32 %s2, 4
      %s45 = int_to_ptr.hbm [resolvable:$true] %s44
      %s46 = sshll.u32 [#allocation7], 4
      %s47 = int_to_ptr.vmem [resolvable:$true] %s46
      %52 = dma.hbm_to_vmem [thread:$0]  %s45, 512, %s47, [#allocation6], 128, 128, 8
    $region13: #{tpu_custom_call.1} parent=1 // pred_fallthru
      _
    // Predicated region
    $region14: #{tpu_custom_call.1} parent=1 // pred_check
      _
    $region15: #{tpu_custom_call.1} parent=1 // pred_check_branch
      %54 = sbr.rel (0) target = $region17
    $region16: #{tpu_custom_call.1} parent=1 // pred_region
      %56 = vsyncadd [#allocation9], 0
      %s57 = sshll.u32 %s3, 4
      %s58 = int_to_ptr.hbm [resolvable:$true] %s57
      %s59 = sshll.u32 [#allocation8], 4
      %s60 = int_to_ptr.vmem [resolvable:$true] %s59
      %65 = dma.hbm_to_vmem [thread:$0]  %s58, 2048, %s60, [#allocation9], 128, 128, 8
    $region17: #{tpu_custom_call.1} parent=1 // pred_fallthru
      _
    // Predicated region
    $region18: #{tpu_custom_call.1} parent=1 // pred_check
      _
    $region19: #{tpu_custom_call.1} parent=1 // pred_check_branch
      %67 = sbr.rel (0) target = $region21
    $region20: #{tpu_custom_call.1} parent=1 // pred_region
      _
    $region21: #{tpu_custom_call.1} parent=1 // pred_fallthru
      _
    // Predicated region
    $region22: #{tpu_custom_call.1} parent=1 // pred_check
      _
    $region23: #{tpu_custom_call.1} parent=1 // pred_check_branch
      %69 = sbr.rel (0) target = $region25
    $region24: #{tpu_custom_call.1} parent=1 // pred_region
      %71 = dma.done [#allocation3], 256
    $region25: #{tpu_custom_call.1} parent=1 // pred_fallthru
      _
    // Predicated region
    $region26: #{tpu_custom_call.1} parent=1 // pred_check
      _
    $region27: #{tpu_custom_call.1} parent=1 // pred_check_branch
      %73 = sbr.rel (0) target = $region29
    $region28: #{tpu_custom_call.1} parent=1 // pred_region
      %75 = dma.done [#allocation6], 256
    $region29: #{tpu_custom_call.1} parent=1 // pred_fallthru
      _
    // Predicated region
    $region30: #{tpu_custom_call.1} parent=1 // pred_check
      _
    $region31: #{tpu_custom_call.1} parent=1 // pred_check_branch
      %77 = sbr.rel (0) target = $region33
    $region32: #{tpu_custom_call.1} parent=1 // pred_region
      %79 = dma.done [#allocation6], 512
    $region33: #{tpu_custom_call.1} parent=1 // pred_fallthru
      _
    // Predicated region
    $region34: #{tpu_custom_call.1} parent=1 // pred_check
      _
    $region35: #{tpu_custom_call.1} parent=1 // pred_check_branch
      %81 = sbr.rel (0) target = $region37
    $region36: #{tpu_custom_call.1} parent=1 // pred_region
      %83 = dma.done [#allocation9], 2048
    $region37: #{tpu_custom_call.1} parent=1 // pred_fallthru
      _
    %v84 = vld [vmem:[%s4] sm:$0x3]
    %v85 = vld [vmem:[#allocation5] sm:$0xff]
    %v86 = vld [vmem:[#allocation5 + $0x8] sm:$0xff]
    %v87 = vld [vmem:[#allocation7] sm:$0xff]
    %v88 = vld [vmem:[#allocation7 + $0x8] sm:$0xff]
    %v89 = vld [vmem:[#allocation7 + $0x10] sm:$0xff]
    %v90 = vld [vmem:[#allocation7 + $0x18] sm:$0xff]
    %vm91 = vcmask 261120
    %v93 = vsel %vm91, %v85, 0
    %v96 = vsel %vm91, %v86, 0
    %98 = vmatpush.msra.mxu0 0.0
    %99 = vmatpush.msra.mxu0 0.0
    %100 = vmatpush.msra.mxu0 0.0
    %101 = vmatpush.msra.mxu0 0.0
    %102 = vmatpush.msra.mxu0 0.0
    %103 = vmatpush.msra.mxu0 0.0
    %104 = vmatpush.msra.mxu0 0.0
    %105 = vmatpush.msra.mxu0 0.0
    %106 = vmatpush.msra.mxu0 0.0
    %107 = vmatpush.msra.mxu0 0.0
    %108 = vmatpush.msra.mxu0 0.0
    %109 = vmatpush.msra.mxu0 0.0
    %110 = vmatpush.msra.mxu0 %v90
    %111 = vmatpush.msra.mxu0 %v89
    %112 = vmatpush.msra.mxu0 %v88
    %113 = vmatpush.msra.mxu0 %v87
    %114 = vmatmul.f32.gmra.mxu0 %v93
    %v115 = vpop.f32.mrf.mxu0
    %v116 = vadd.f32 0.0, %v115
    %117 = vmatmul.f32.gmra.mxu0 %v96
    %v118 = vpop.f32.mrf.mxu0
    %v119 = vadd.f32 0.0, %v118
    %120 = vdwg.mxu0
    %v121 = vld [vmem:[#allocation2] sm:$0xff]
    %v122 = vld [vmem:[#allocation2 + $0x8] sm:$0xff]
    %v123 = vperm.slane %v84, 0
    %vm124 = vcmask 130048
    %v126 = vsel %vm124, %v121, 0
    %v129 = vsel %vm124, %v122, 0
    %131 = vmatpush.msra.mxu0 0.0
    %132 = vmatpush.msra.mxu0 0.0
    %133 = vmatpush.msra.mxu0 0.0
    %134 = vmatpush.msra.mxu0 0.0
    %135 = vmatpush.msra.mxu0 0.0
    %136 = vmatpush.msra.mxu0 0.0
    %137 = vmatpush.msra.mxu0 0.0
    %138 = vmatpush.msra.mxu0 0.0
    %139 = vmatpush.msra.mxu0 0.0
    %140 = vmatpush.msra.mxu0 0.0
    %141 = vmatpush.msra.mxu0 0.0
    %142 = vmatpush.msra.mxu0 0.0
    %143 = vmatpush.msra.mxu0 0.0
    %144 = vmatpush.msra.mxu0 0.0
    %145 = vmatpush.msra.mxu0 %v119
    %146 = vmatpush.msra.mxu0 %v116
    %147 = vmatmul.f32.gmra.mxu0 %v126
    %v148 = vpop.f32.mrf.mxu0
    %v149 = vadd.f32 %v123, %v148
    %150 = vmatmul.f32.gmra.mxu0 %v129
    %v151 = vpop.f32.mrf.mxu0
    %v152 = vadd.f32 %v123, %v151
    %153 = vdwg.mxu0
    %v154 = vmax.f32 %v149, 0.0
    %v155 = vmax.f32 %v152, 0.0
    %v156 = vld [vmem:[#allocation8] sm:$0xff]
    %v157 = vld [vmem:[#allocation8 + $0x8] sm:$0xff]
    %v158 = vld [vmem:[#allocation8 + $0x10] sm:$0xff]
    %v159 = vld [vmem:[#allocation8 + $0x18] sm:$0xff]
    %v160 = vld [vmem:[#allocation8 + $0x20] sm:$0xff]
    %v161 = vld [vmem:[#allocation8 + $0x28] sm:$0xff]
    %v162 = vld [vmem:[#allocation8 + $0x30] sm:$0xff]
    %v163 = vld [vmem:[#allocation8 + $0x38] sm:$0xff]
    %v164 = vld [vmem:[#allocation8 + $0x40] sm:$0xff]
    %v165 = vld [vmem:[#allocation8 + $0x48] sm:$0xff]
    %v166 = vld [vmem:[#allocation8 + $0x50] sm:$0xff]
    %v167 = vld [vmem:[#allocation8 + $0x58] sm:$0xff]
    %v168 = vld [vmem:[#allocation8 + $0x60] sm:$0xff]
    %v169 = vld [vmem:[#allocation8 + $0x68] sm:$0xff]
    %v170 = vld [vmem:[#allocation8 + $0x70] sm:$0xff]
    %v171 = vld [vmem:[#allocation8 + $0x78] sm:$0xff]
    %172 = vmatpush.msra.mxu0 %v171
    %173 = vmatpush.msra.mxu0 %v170
    %174 = vmatpush.msra.mxu0 %v169
    %175 = vmatpush.msra.mxu0 %v168
    %176 = vmatpush.msra.mxu0 %v167
    %177 = vmatpush.msra.mxu0 %v166
    %178 = vmatpush.msra.mxu0 %v165
    %179 = vmatpush.msra.mxu0 %v164
    %180 = vmatpush.msra.mxu0 %v163
    %181 = vmatpush.msra.mxu0 %v162
    %182 = vmatpush.msra.mxu0 %v161
    %183 = vmatpush.msra.mxu0 %v160
    %184 = vmatpush.msra.mxu0 %v159
    %185 = vmatpush.msra.mxu0 %v158
    %186 = vmatpush.msra.mxu0 %v157
    %187 = vmatpush.msra.mxu0 %v156
    %188 = vmatmul.f32.gmra.mxu0 %v154
    %v189 = vpop.f32.mrf.mxu0
    %v190 = vadd.f32 0.0, %v189
    %191 = vmatmul.f32.gmra.mxu0 %v155
    %v192 = vpop.f32.mrf.mxu0
    %v193 = vadd.f32 0.0, %v192
    %194 = vdwg.mxu0
    %v195 = vperm.slane %v84, 1
    %196 = vmatpush.msra.mxu0 0.0
    %197 = vmatpush.msra.mxu0 0.0
    %198 = vmatpush.msra.mxu0 0.0
    %199 = vmatpush.msra.mxu0 0.0
    %200 = vmatpush.msra.mxu0 0.0
    %201 = vmatpush.msra.mxu0 0.0
    %202 = vmatpush.msra.mxu0 0.0
    %203 = vmatpush.msra.mxu0 0.0
    %204 = vmatpush.msra.mxu0 0.0
    %205 = vmatpush.msra.mxu0 0.0
    %206 = vmatpush.msra.mxu0 0.0
    %207 = vmatpush.msra.mxu0 0.0
    %208 = vmatpush.msra.mxu0 0.0
    %209 = vmatpush.msra.mxu0 0.0
    %210 = vmatpush.msra.mxu0 %v193
    %211 = vmatpush.msra.mxu0 %v190
    %212 = vmatmul.f32.gmra.mxu0 %v126
    %v213 = vpop.f32.mrf.mxu0
    %v214 = vadd.f32 %v195, %v213
    %215 = vmatmul.f32.gmra.mxu0 %v129
    %v216 = vpop.f32.mrf.mxu0
    %v217 = vadd.f32 %v195, %v216
    %218 = vdwg.mxu0
    %219 = vst [vmem:[#allocation10] sm:$0xff] %v214
    %220 = vst [vmem:[#allocation10 + $0x8] sm:$0xff] %v217
    // Predicated region
    $region38: #{tpu_custom_call.1} parent=1 // pred_check
      _
    $region39: #{tpu_custom_call.1} parent=1 // pred_check_branch
      %222 = sbr.rel (0) target = $region41
    $region40: #{tpu_custom_call.1} parent=1 // pred_region
      %224 = vsyncadd [#allocation4], 0
      %s225 = sshll.u32 [#allocation10], 4
      %s226 = int_to_ptr.vmem [resolvable:$true] %s225
      %s227 = sshll.u32 %s5, 4
      %s228 = int_to_ptr.hbm [resolvable:$true] %s227
      %233 = dma.vmem_to_hbm [thread:$0]  %s226, 256, %s228, [#allocation4], 128, 128, 8
    $region41: #{tpu_custom_call.1} parent=1 // pred_fallthru
      _
    // Predicated region
    $region42: #{tpu_custom_call.1} parent=1 // pred_check
      _
    $region43: #{tpu_custom_call.1} parent=1 // pred_check_branch
      %235 = sbr.rel (0) target = $region45
    $region44: #{tpu_custom_call.1} parent=1 // pred_region
      %237 = dma.done [#allocation4], 256
    $region45: #{tpu_custom_call.1} parent=1 // pred_fallthru
      _
    %238 = vsyncpa [#allocation3], 1
    %239 = vsyncpa [#allocation6], 1
    %240 = vsyncpa [#allocation9], 1
    %241 = vsyncpa [#allocation4], 1

</llo_original>
